<compile_context>
chip_gen: v6e
topology: v6e:2x2x1
jax: 0.10.0
libtpu: 0.0.40
codegen_flags: <defaults>
</compile_context>

<pallas_src>
import jax
import jax.numpy as jnp
from jax.experimental import pallas as pl
from jax.experimental.pallas import tpu as pltpu

_TAN_PI_8 = 0.4142135623730951   # tan(pi/8)
_PI_4 = 0.7853981633974483
_PI_2 = 1.5707963267948966
_PI = 3.141592653589793


def _phase_kernel(phase_ref, x_ref, out_ref):
    """out = phase - atan2(imag, real), elementwise.

    phase_ref : SMEM (1,) f32 runtime scalar
    x_ref     : VMEM (2, TR, L) -- plane 0 = real, plane 1 = imag
    out_ref   : VMEM (1, TR, L)
    """
    re = x_ref[0].astype(jnp.float32)
    im = x_ref[1].astype(jnp.float32)

    ax = jnp.abs(re)
    ay = jnp.abs(im)
    mn = jnp.minimum(ax, ay)
    mx = jnp.maximum(ax, ay)

    # Guarded ratio in [0, 1]; atan2(0, 0) must come out as 0 (torch semantics).
    t = mn / jnp.where(mx > 0.0, mx, 1.0)

    # atan(t) on [0, 1] via one Cephes-style range reduction:
    #   t > tan(pi/8): atan(t) = pi/4 + atan((t - 1) / (t + 1))
    big = t > _TAN_PI_8
    u = jnp.where(big, (t - 1.0) / (t + 1.0), t)
    z = u * u
    p = ((((8.05374449538e-2 * z - 1.38776856032e-1) * z
           + 1.99777106478e-1) * z
          - 3.33329491539e-1) * z) * u + u
    r = jnp.where(big, p + _PI_4, p)            # atan(mn / mx) in [0, pi/4]

    # Quadrant reconstruction.
    r = jnp.where(ay > ax, _PI_2 - r, r)        # atan(|im| / |re|) in [0, pi/2]
    r = jnp.where(re < 0.0, _PI - r, r)         # left half-plane
    r = jnp.where(im < 0.0, -r, r)              # sign of the imaginary part

    phase = phase_ref[0]
    out_ref[0] = (phase - r).astype(out_ref.dtype)


def _plan_tiling(m: int, itemsize: int, n: int):
    """Return (m_pad, rows, lanes, row_tile) for per-half element count m.

    Guarantees: rows * lanes == m_pad >= m, row_tile divides rows, and the
    last two block dims (row_tile, lanes) are multiples of (8, 128) or equal
    to the full array dims.
    """
    sub = 8 * max(1, 4 // itemsize)     # packed sublane rows: 8 f32 / 16 bf16 / 32 int8
    lanes = 128
    # Dense-lane path: pad the flattened per-half length to a lane multiple so
    # stores are full-lane vst, never masked partial stores.
    m_pad = ((m + lanes - 1) // lanes) * lanes
    rows = m_pad // lanes

    # ~2 MiB output buffer cap (input block is 2x that); with double buffering
    # the footprint is ~12 MiB, under v5e's 16 MiB scoped-VMEM default.
    max_rows = max(sub, (2 * 1024 * 1024) // (lanes * itemsize))

    # If the row count is large *and* ragged, pad it to the packed-sublane
    # granularity so a bounded, (8,128)-legal row tile exists.
    if rows > max_rows and rows % sub != 0:
        rows = ((rows + sub - 1) // sub) * sub
        m_pad = rows * lanes

    if rows % sub == 0:
        row_tile = sub
        while row_tile * 2 <= max_rows and rows % (row_tile * 2) == 0:
            row_tile *= 2
    else:
        row_tile = rows                 # full-extent sublane dim (legal, bounded)

    # v7x has 2 TensorCores: make sure the parallel grid has >= 2 steps when
    # the row axis can be split further without losing sublane density.
    while n * (rows // row_tile) < 2 and row_tile % (2 * sub) == 0:
        row_tile //= 2

    return m_pad, rows, lanes, row_tile


def complex_phase_value_constraint(x: jax.Array, phase=0.0) -> jax.Array:
    """x: [N, C, H, W] real array, C even. Returns phase - angle(make_complex(x))."""
    N, C, H, W = x.shape
    assert C % 2 == 0, "channel dim must be even (real/imag halves)"
    ch = C // 2
    m = ch * H * W                                  # elements per half per sample
    itemsize = jnp.dtype(x.dtype).itemsize
    m_pad, rows, lanes, row_tile = _plan_tiling(m, itemsize, N)

    # Contiguous reshape only: plane (n, 0) = real half, plane (n, 1) = imag half.
    xf = x.reshape(N, 2, m)
    if m_pad != m:
        # Pad-and-slice keeps the kernel on the dense full-lane path for odd H*W.
        xf = jnp.pad(xf, ((0, 0), (0, 0), (0, m_pad - m)))
    x2 = xf.reshape(N * 2, rows, lanes)

    phase_arr = jnp.asarray(phase, dtype=jnp.float32).reshape((1,))

    numel = N * m_pad
    cost = pl.CostEstimate(
        flops=30 * numel,               # abs/min/max/selects + arctan polynomial
        transcendentals=2 * numel,      # two divides per element
        bytes_accessed=3 * numel * itemsize,
    )

    out = pl.pallas_call(
        _phase_kernel,
        out_shape=jax.ShapeDtypeStruct((N, rows, lanes), x.dtype),
        grid=(N, rows // row_tile),
        in_specs=[
            pl.BlockSpec(memory_space=pltpu.MemorySpace.SMEM),              # phase scalar
            pl.BlockSpec((2, row_tile, lanes), lambda n, r: (n, r, 0)),     # real+imag planes
        ],
        out_specs=pl.BlockSpec((1, row_tile, lanes), lambda n, r: (n, r, 0)),
        compiler_params=pltpu.CompilerParams(
            dimension_semantics=("parallel", "parallel"),
        ),
        cost_estimate=cost,
    )(phase_arr, x2)

    out = out.reshape(N, m_pad)[:, :m].reshape(N, ch, H, W)
    return out


if __name__ == "__main__":
    key = jax.random.PRNGKey(0)
    N, C, H, W = 2, 4, 16, 16
    x = jax.random.normal(key, (N, C, H, W), dtype=jnp.float32)

    phase = 0.5  # module constructor argument

    out = complex_phase_value_constraint(x, phase=phase)
    out = jax.block_until_ready(out)

    # Reference (plain JAX / XLA) for correctness check.
    ch = C // 2
    ref = phase - jnp.arctan2(x[:, ch:], x[:, :ch])
    assert out.shape == (N, ch, H, W)
    assert out.dtype == x.dtype
    assert jnp.allclose(out, ref, atol=1e-5, rtol=1e-5), "mismatch vs reference"

    print("KERNEL_OK")
</pallas_src>

<mosaic_0001>
module attributes {stable_mosaic.version = 11 : i64} {
  func.func @_phase_kernel(%arg0: i32, %arg1: i32, %arg2: memref<1xf32, #tpu.memory_space<smem>>, %arg3: memref<2x4x128xf32, #tpu.memory_space<vmem>>, %arg4: memref<1x4x128xf32, #tpu.memory_space<vmem>>) attributes {dimension_semantics = [#tpu.dimension_semantics<parallel>, #tpu.dimension_semantics<parallel>], iteration_bounds = array<i64: 2, 1>, scalar_prefetch = 0 : i64, scratch_operands = 0 : i64, tpu.core_type = #tpu.core_type<tc>, window_params = [{transform_indices = @transform_0, window_bounds = array<i64: 1>}, {transform_indices = @transform_1, window_bounds = array<i64: 2, 4, 128>}, {transform_indices = @transform_2, window_bounds = array<i64: 1, 4, 128>}]} {
    %c0 = arith.constant 0 : index
    %c0_0 = arith.constant 0 : index
    %c0_1 = arith.constant 0 : index
    %0 = vector.load %arg3[%c0, %c0_0, %c0_1] : memref<2x4x128xf32, #tpu.memory_space<vmem>>, vector<1x4x128xf32>
    %1 = vector.shape_cast %0 : vector<1x4x128xf32> to vector<4x128xf32>
    %c1 = arith.constant 1 : index
    %c0_2 = arith.constant 0 : index
    %c0_3 = arith.constant 0 : index
    %2 = vector.load %arg3[%c1, %c0_2, %c0_3] : memref<2x4x128xf32, #tpu.memory_space<vmem>>, vector<1x4x128xf32>
    %3 = vector.shape_cast %2 : vector<1x4x128xf32> to vector<4x128xf32>
    %4 = math.absf %1 : vector<4x128xf32>
    %5 = math.absf %3 : vector<4x128xf32>
    %6 = arith.minimumf %4, %5 : vector<4x128xf32>
    %7 = arith.maximumf %4, %5 : vector<4x128xf32>
    %cst = arith.constant 0.000000e+00 : f32
    %8 = vector.broadcast %cst : f32 to vector<4x128xf32>
    %9 = arith.cmpf ogt, %7, %8 : vector<4x128xf32>
    %cst_4 = arith.constant 1.000000e+00 : f32
    %10 = vector.broadcast %cst_4 : f32 to vector<4x128xf32>
    %11 = arith.select %9, %7, %10 : vector<4x128xi1>, vector<4x128xf32>
    %12 = arith.divf %6, %11 : vector<4x128xf32>
    %cst_5 = arith.constant 0.414213568 : f32
    %13 = vector.broadcast %cst_5 : f32 to vector<4x128xf32>
    %14 = arith.cmpf ogt, %12, %13 : vector<4x128xf32>
    %cst_6 = arith.constant 1.000000e+00 : f32
    %15 = vector.broadcast %cst_6 : f32 to vector<4x128xf32>
    %16 = arith.subf %12, %15 : vector<4x128xf32>
    %cst_7 = arith.constant 1.000000e+00 : f32
    %17 = vector.broadcast %cst_7 : f32 to vector<4x128xf32>
    %18 = arith.addf %12, %17 : vector<4x128xf32>
    %19 = arith.divf %16, %18 : vector<4x128xf32>
    %20 = arith.select %14, %19, %12 : vector<4x128xi1>, vector<4x128xf32>
    %21 = arith.mulf %20, %20 : vector<4x128xf32>
    %cst_8 = arith.constant 0.0805374458 : f32
    %22 = vector.broadcast %cst_8 : f32 to vector<4x128xf32>
    %23 = arith.mulf %22, %21 : vector<4x128xf32>
    %cst_9 = arith.constant 0.138776854 : f32
    %24 = vector.broadcast %cst_9 : f32 to vector<4x128xf32>
    %25 = arith.subf %23, %24 : vector<4x128xf32>
    %26 = arith.mulf %25, %21 : vector<4x128xf32>
    %cst_10 = arith.constant 0.199777111 : f32
    %27 = vector.broadcast %cst_10 : f32 to vector<4x128xf32>
    %28 = arith.addf %26, %27 : vector<4x128xf32>
    %29 = arith.mulf %28, %21 : vector<4x128xf32>
    %cst_11 = arith.constant 0.333329499 : f32
    %30 = vector.broadcast %cst_11 : f32 to vector<4x128xf32>
    %31 = arith.subf %29, %30 : vector<4x128xf32>
    %32 = arith.mulf %31, %21 : vector<4x128xf32>
    %33 = arith.mulf %32, %20 : vector<4x128xf32>
    %34 = arith.addf %33, %20 : vector<4x128xf32>
    %cst_12 = arith.constant 0.785398185 : f32
    %35 = vector.broadcast %cst_12 : f32 to vector<4x128xf32>
    %36 = arith.addf %34, %35 : vector<4x128xf32>
    %37 = arith.select %14, %36, %34 : vector<4x128xi1>, vector<4x128xf32>
    %38 = arith.cmpf ogt, %5, %4 : vector<4x128xf32>
    %cst_13 = arith.constant 1.57079637 : f32
    %39 = vector.broadcast %cst_13 : f32 to vector<4x128xf32>
    %40 = arith.subf %39, %37 : vector<4x128xf32>
    %41 = arith.select %38, %40, %37 : vector<4x128xi1>, vector<4x128xf32>
    %cst_14 = arith.constant 0.000000e+00 : f32
    %42 = vector.broadcast %cst_14 : f32 to vector<4x128xf32>
    %43 = arith.cmpf olt, %1, %42 : vector<4x128xf32>
    %cst_15 = arith.constant 3.14159274 : f32
    %44 = vector.broadcast %cst_15 : f32 to vector<4x128xf32>
    %45 = arith.subf %44, %41 : vector<4x128xf32>
    %46 = arith.select %43, %45, %41 : vector<4x128xi1>, vector<4x128xf32>
    %cst_16 = arith.constant 0.000000e+00 : f32
    %47 = vector.broadcast %cst_16 : f32 to vector<4x128xf32>
    %48 = arith.cmpf olt, %3, %47 : vector<4x128xf32>
    %cst_17 = arith.constant 0.000000e+00 : f32
    %49 = vector.broadcast %cst_17 : f32 to vector<4x128xf32>
    %50 = arith.subf %49, %46 : vector<4x128xf32>
    %51 = arith.select %48, %50, %46 : vector<4x128xi1>, vector<4x128xf32>
    %c0_18 = arith.constant 0 : index
    %52 = memref.load %arg2[%c0_18] : memref<1xf32, #tpu.memory_space<smem>>
    %53 = vector.broadcast %52 : f32 to vector<4x128xf32>
    %54 = arith.subf %53, %51 : vector<4x128xf32>
    %c0_19 = arith.constant 0 : index
    %c0_20 = arith.constant 0 : index
    %c0_21 = arith.constant 0 : index
    %55 = vector.load %arg4[%c0_19, %c0_20, %c0_21] : memref<1x4x128xf32, #tpu.memory_space<vmem>>, vector<1x4x128xf32>
    %56 = vector.shape_cast %55 : vector<1x4x128xf32> to vector<4x128xf32>
    %57 = vector.shape_cast %54 : vector<4x128xf32> to vector<1x4x128xf32>
    tpu.vector_store %arg4[%c0_19, %c0_20, %c0_21], %57 {strides = array<i32>} : memref<1x4x128xf32, #tpu.memory_space<vmem>>, vector<1x4x128xf32>,
    return
  }
  func.func @transform_0(%arg0: i32, %arg1: i32) -> i32 {
    %c0_i32 = arith.constant 0 : i32
    %c0_i32_0 = arith.constant 0 : i32
    return %c0_i32 : i32
  }
  func.func @transform_1(%arg0: i32, %arg1: i32) -> (i32, i32, i32) {
    %c0_i32 = arith.constant 0 : i32
    %c0_i32_0 = arith.constant 0 : i32
    return %arg0, %arg1, %c0_i32 : i32, i32, i32
  }
  func.func @transform_2(%arg0: i32, %arg1: i32) -> (i32, i32, i32) {
    %c0_i32 = arith.constant 0 : i32
    %c0_i32_0 = arith.constant 0 : i32
    return %arg0, %arg1, %c0_i32 : i32, i32, i32
  }
}

</mosaic_0001>

<llo_original>
// kernel: tpu_custom_call.1
$region0: #{tpu_custom_call.1}
  #allocation0 [shape = 'u32[]', space=smem, size = 0x4, offset = 0x4, fixed_abs, tag = 'smem constant byte address 0x4 - core index']
  #allocation1 [shape = 'u32[144,128]{1,0:T(1,128)}', space=vmem, size = 0x12000, scoped, tag = 'internal scratch']
  #allocation2 [shape = 'f32[1]{0:T(128)S(6)}', space=smem, size = 0x200, scoped, tag = 'scoped memory for tpu_custom_call.1']
  %s0 = inlined_call_operand.<no memory space> [shape: f32[1], index: 0, kind: input, shape index: {}]
  %s1 = inlined_call_operand.hbm [shape: f32[4,4,128], index: 1, kind: input, shape index: {}]
  %s2 = inlined_call_operand.hbm [shape: f32[2,4,128], index: 2, kind: output, shape index: {}]
  %s3 = sld [smem:[#allocation0]]
  $region45: #{tpu_custom_call.1} parent=0
    _
  %s5 = ssub.s32 1, %s3
  %s6 = scalar_select 0, %s5, %s3
  %7 = sst [smem:[#allocation2]] %s0
  $region1: #{tpu_custom_call.1} parent=0
    #allocation3 [shape = 'u8[8192]{0}', space=vmem, size = 0x2000, scoped, tag = 'input window, operand 1']
    #allocation4 [shape = 's32[2]{0}', space=sflag, size = 0x8, scoped, tag = 'scoped memory for tpu_custom_call.1']
    #allocation5 [shape = 's32[2]{0}', space=sflag, size = 0x8, scoped, tag = 'scoped memory for tpu_custom_call.1']
    #allocation6 [shape = 'u8[4096]{0}', space=vmem, size = 0x1000, scoped, tag = 'output window, operand 0']
    %8 = vsyncpa [#allocation4], 0
    %s9 = scalar_lea.sflag [#allocation4], 1
    %10 = vsyncpa %s9, 0
    %11 = vsyncpa [#allocation5], 0
    %s12 = scalar_lea.sflag [#allocation5], 1
    %13 = vsyncpa %s12, 0
    loop: start=0, step=1, limit=4
    $region2: #{tpu_custom_call.1} parent=1 // loop_pre_header
      _
    $region3: #{tpu_custom_call.1} parent=1 // loop_header
      %s15 = sphi 0, %s19
      %p16 = scmp.ge.s32.totalorder %s15, 4
      %s22 = sphi 0, %s34
      %s23 = sphi 0, %s30
      %s24 = sphi 0, %s22
      %s25 = sphi 0, %s23
      %s26 = sphi 0, %s24
      %s27 = sphi 0, %s25
      %s35 = sphi 0, %s35
      %s37 = sphi 0, %s35
      %s38 = sphi 0, %s37
      %s52 = sphi 0, %s38
      %s60 = sphi 0, %s62
      %s63 = sphi 0, %s60
      %s64 = sphi 0, %s63
      %s80 = sphi 0, %s64
      %s88 = sphi 0, %s90
      %s91 = sphi 0, %s88
      %s92 = sphi 0, %s91
      %s108 = sphi 0, %s92
    $region4: #{tpu_custom_call.1} parent=1 // loop_header_branch
      %18 = sbr.rel (%p16) target = $region8
    $region5: #{tpu_custom_call.1} parent=1 // loop_body
      %s20 = ssub.s32 %s15, 1
      %s21 = ssub.s32 %s15, 2
      %s28 = sadd.s32 1, %s23
      %p29 = scmp.ge.s32.totalorder %s28, 1
      %s30 = scalar_select %p29, 0, %s28
      %s31 = sadd.s32 1, %s22
      %s32 = scalar_select %p29, %s31, %s22
      %p33 = scmp.ge.s32.totalorder %s32, 2
      %s34 = scalar_select %p33, 0, %s32
      %s36 = sadd.s32 %s35, 1
      %p39 = scmp.eq.s32.totalorder %s15, 1
      %p40 = scmp.ne.s32.totalorder %s35, %s37
      %p41 = scmp.eq.s32.totalorder %s15, 0
      %p42 = por %p40, %p41
      %p43 = scmp.ne.s32.totalorder %s35, %s37
      %p44 = scmp.eq.s32.totalorder %s20, 1
      %p45 = por %p43, %p44
      %p46 = scmp.ne.s32.totalorder %s37, %s38
      %p47 = scmp.eq.s32.totalorder %s20, 0
      %p48 = por %p46, %p47
      %p49 = scmp.ne.s32.totalorder %s37, %s38
      %p50 = scmp.eq.s32.totalorder %s21, 1
      %p51 = por %p49, %p50
      %p53 = scmp.ne.s32.totalorder %s38, %s52
      %p54 = scmp.eq.s32.totalorder %s21, 0
      %p55 = por %p53, %p54
      %s56 = ssub.s32 %s22, %s34
      %s57 = ssub.s32 %s23, %s30
      %s58 = sor.u32 %s56, %s57
      %p59 = scmp.eq.s32.totalorder %s58, 0
      %s61 = sadd.s32 %s60, 1
      %s62 = scalar_select %p59, %s60, %s61
      %p65 = pneg %p59
      %p66 = scmp.eq.s32.totalorder %s15, 1
      %p67 = por %p65, %p66
      %p68 = scmp.ne.s32.totalorder %s60, %s63
      %p69 = scmp.eq.s32.totalorder %s15, 0
      %p70 = por %p68, %p69
      %p71 = scmp.ne.s32.totalorder %s60, %s63
      %p72 = scmp.eq.s32.totalorder %s20, 1
      %p73 = por %p71, %p72
      %p74 = scmp.ne.s32.totalorder %s63, %s64
      %p75 = scmp.eq.s32.totalorder %s20, 0
      %p76 = por %p74, %p75
      %p77 = scmp.ne.s32.totalorder %s63, %s64
      %p78 = scmp.eq.s32.totalorder %s21, 1
      %p79 = por %p77, %p78
      %p81 = scmp.ne.s32.totalorder %s64, %s80
      %p82 = scmp.eq.s32.totalorder %s21, 0
      %p83 = por %p81, %p82
      %s84 = ssub.s32 %s22, %s34
      %s85 = ssub.s32 %s23, %s30
      %s86 = sor.u32 %s84, %s85
      %p87 = scmp.eq.s32.totalorder %s86, 0
      %s89 = sadd.s32 %s88, 1
      %s90 = scalar_select %p87, %s88, %s89
      %p93 = pneg %p87
      %p94 = scmp.eq.s32.totalorder %s15, 1
      %p95 = por %p93, %p94
      %p96 = scmp.ne.s32.totalorder %s88, %s91
      %p97 = scmp.eq.s32.totalorder %s15, 0
      %p98 = por %p96, %p97
      %p99 = scmp.ne.s32.totalorder %s88, %s91
      %p100 = scmp.eq.s32.totalorder %s20, 1
      %p101 = por %p99, %p100
      %p102 = scmp.ne.s32.totalorder %s91, %s92
      %p103 = scmp.eq.s32.totalorder %s20, 0
      %p104 = por %p102, %p103
      %p105 = scmp.ne.s32.totalorder %s91, %s92
      %p106 = scmp.eq.s32.totalorder %s21, 1
      %p107 = por %p105, %p106
      %p109 = scmp.ne.s32.totalorder %s92, %s108
      %p110 = scmp.eq.s32.totalorder %s21, 0
      %p111 = por %p109, %p110
      %p112 = scmp.le.s32.totalorder 1, %s15
      %p113 = scmp.lt.s32.totalorder %s15, 3
      %p114 = pnand %p112, %p113
      %p115 = pneg %p114
      // Predicated region
      $region9: #{tpu_custom_call.1} parent=5 // pred_check
        _
      $region10: #{tpu_custom_call.1} parent=5 // pred_check_branch
        %117 = sbr.rel (%p114) target = $region12
      $region11: #{tpu_custom_call.1} parent=5 // pred_region
        %s118 = ssub.s32 %s15, 1
        // Predicated region
        $region13: #{tpu_custom_call.1} parent=11 // pred_check
          %p119 = pneg %p48
        $region14: #{tpu_custom_call.1} parent=11 // pred_check_branch
          %121 = sbr.rel (%p119) target = $region16
        $region15: #{tpu_custom_call.1} parent=11 // pred_region
          _
        $region16: #{tpu_custom_call.1} parent=11 // pred_fallthru
          _
      $region12: #{tpu_custom_call.1} parent=5 // pred_fallthru
        _
      %p122 = scmp.lt.s32.totalorder %s15, 2
      // Predicated region
      $region17: #{tpu_custom_call.1} parent=5 // pred_check
        %p123 = pneg %p122
      $region18: #{tpu_custom_call.1} parent=5 // pred_check_branch
        %125 = sbr.rel (%p123) target = $region20
      $region19: #{tpu_custom_call.1} parent=5 // pred_region
        // Predicated region
        $region21: #{tpu_custom_call.1} parent=19 // pred_check
          %p126 = pneg %p70
        $region22: #{tpu_custom_call.1} parent=19 // pred_check_branch
          %128 = sbr.rel (%p126) target = $region24
        $region23: #{tpu_custom_call.1} parent=19 // pred_region
          %s129 = sand.u32 %s60, 1
          %s130 = scalar_lea.sflag [#allocation4], %s129
          %s131 = sand.u32 %s60, 1
          %s132 = smul.addr %s131, 8
          %s133 = scalar_lea.vmem [#allocation3], %s132
          %s134 = smul.u32 2, %s22
          %s136 = ssub.s32 128, 128
          %137 = vsyncadd %s130, %s136
          %s138 = sadd.s32 %s23, %s134
          %s139 = smul.addr %s138, 64
          %s140 = scalar_lea.hbm %s1, %s139
          %s141 = sshll.u32 %s133, 4
          %s142 = int_to_ptr.vmem [resolvable:$true] %s141
          %147 = dma.hbm_to_vmem [thread:$0]  %s140, 128, %s142, %s130, 64, 64, 4
        $region24: #{tpu_custom_call.1} parent=19 // pred_fallthru
          _
      $region20: #{tpu_custom_call.1} parent=5 // pred_fallthru
        _
      %p148 = scmp.le.s32.totalorder 1, %s15
      %p149 = scmp.lt.s32.totalorder %s15, 3
      %p150 = pnand %p148, %p149
      %p151 = pneg %p150
      // Predicated region
      $region25: #{tpu_custom_call.1} parent=5 // pred_check
        _
      $region26: #{tpu_custom_call.1} parent=5 // pred_check_branch
        %153 = sbr.rel (%p150) target = $region28
      $region27: #{tpu_custom_call.1} parent=5 // pred_region
        %s154 = ssub.s32 %s15, 1
        %s155 = sand.u32 %s63, 1
        %s156 = scalar_lea.sflag [#allocation4], %s155
        %s157 = sand.u32 %s63, 1
        %s158 = smul.addr %s157, 8
        %s159 = scalar_lea.vmem [#allocation3], %s158
        // Predicated region
        $region29: #{tpu_custom_call.1} parent=27 // pred_check
          %p160 = pneg %p76
        $region30: #{tpu_custom_call.1} parent=27 // pred_check_branch
          %162 = sbr.rel (%p160) target = $region32
        $region31: #{tpu_custom_call.1} parent=27 // pred_region
          %163 = dma.done %s156, 128
        $region32: #{tpu_custom_call.1} parent=27 // pred_fallthru
          _
        %p164 = pneg %p48
        %p165 = pneg %p45
        %s166 = sand.u32 %s63, 1
        %s167 = scalar_lea.sflag [#allocation4], %s166
        %s168 = sand.u32 %s63, 1
        %s169 = smul.addr %s168, 8
        %s170 = scalar_lea.vmem [#allocation3], %s169
        %p171 = pneg %p76
        %p172 = pneg %p73
        %p173 = pneg %p104
        %p174 = pneg %p101
        %s175 = sand.u32 %s91, 1
        %s176 = scalar_lea.sflag [#allocation5], %s175
        %s177 = sand.u32 %s91, 1
        %s178 = smul.addr %s177, 4
        %s179 = scalar_lea.vmem [#allocation6], %s178
        %s180 = smul.u32 2, %s24
        %v181 = vld [vmem:[%s159] sm:$0xf]
        %s182 = scalar_lea.vmem %s159, 4 [#allocation3]
        %v183 = vld [vmem:[%s182] sm:$0xf]
        %v184 = vand.u32 2147483647, %v181
        %v185 = vand.u32 2147483647, %v183
        %v186 = vmin.f32 %v184, %v185
        %v187 = vmax.f32 %v184, %v185
        %vm188 = vcmp.gt.f32.partialorder %v187, 0.0
        %v189 = vsel %vm188, %v187, 1.0
        %v190 = vrcp.pop %v189
        %v191 = vmul.f32 %v186, %v190
        %vm192 = vcmp.gt.f32.partialorder %v191, 0.41421357
        %v193 = vsub.f32 %v191, 1.0
        %v194 = vadd.f32 %v191, 1.0
        %v195 = vrcp.pop %v194
        %v196 = vmul.f32 %v193, %v195
        %v197 = vsel %vm192, %v196, %v191
        %v198 = vmul.f32 %v197, %v197
        %v199 = vmul.f32 %v198, 0.080537446
        %v200 = vsub.f32 %v199, 0.13877685
        %v201 = vmul.f32 %v200, %v198
        %v202 = vadd.f32 %v201, 0.19977711
        %v203 = vmul.f32 %v202, %v198
        %v204 = vsub.f32 %v203, 0.3333295
        %v205 = vmul.f32 %v204, %v198
        %v206 = vmul.f32 %v205, %v197
        %v207 = vadd.f32 %v206, %v197
        %v208 = vadd.f32 %v207, 0.7853982
        %v209 = vsel %vm192, %v208, %v207
        %vm210 = vcmp.gt.f32.partialorder %v185, %v184
        %v211 = vsub.f32 1.5707964, %v209
        %v212 = vsel %vm210, %v211, %v209
        %vm213 = vcmp.lt.f32.partialorder %v181, 0.0
        %v214 = vsub.f32 3.1415927, %v212
        %v215 = vsel %vm213, %v214, %v212
        %vm216 = vcmp.lt.f32.partialorder %v183, 0.0
        %v217 = vsub.f32 0.0, %v215
        %v218 = vsel %vm216, %v217, %v215
        %s219 = sld [smem:[#allocation2]]
        %v220 = vstv %s219
        %v221 = vsub.f32 %v220, %v218
        %222 = vst [vmem:[%s179] sm:$0xf] %v221
        %s223 = sand.u32 %s91, 1
        %s224 = scalar_lea.sflag [#allocation5], %s223
        %s225 = sand.u32 %s91, 1
        %s226 = smul.addr %s225, 4
        %s227 = scalar_lea.vmem [#allocation6], %s226
        // Predicated region
        $region33: #{tpu_custom_call.1} parent=27 // pred_check
          %p228 = pneg %p101
        $region34: #{tpu_custom_call.1} parent=27 // pred_check_branch
          %230 = sbr.rel (%p228) target = $region36
        $region35: #{tpu_custom_call.1} parent=27 // pred_region
          %s232 = ssub.s32 64, 64
          %233 = vsyncadd %s224, %s232
          %s234 = sadd.s32 %s25, %s24
          %s235 = smul.addr %s234, 64
          %s236 = scalar_lea.hbm %s2, %s235
          %s238 = sshll.u32 %s227, 4
          %s239 = int_to_ptr.vmem [resolvable:$true] %s238
          %241 = dma.vmem_to_hbm [thread:$0]  %s239, 64, %s236, %s224
        $region36: #{tpu_custom_call.1} parent=27 // pred_fallthru
          _
      $region28: #{tpu_custom_call.1} parent=5 // pred_fallthru
        _
      %p242 = scmp.le.s32.totalorder 2, %s15
      // Predicated region
      $region37: #{tpu_custom_call.1} parent=5 // pred_check
        %p243 = pneg %p242
      $region38: #{tpu_custom_call.1} parent=5 // pred_check_branch
        %245 = sbr.rel (%p243) target = $region40
      $region39: #{tpu_custom_call.1} parent=5 // pred_region
        %s246 = ssub.s32 %s15, 2
        // Predicated region
        $region41: #{tpu_custom_call.1} parent=39 // pred_check
          %p247 = pneg %p107
        $region42: #{tpu_custom_call.1} parent=39 // pred_check_branch
          %249 = sbr.rel (%p247) target = $region44
        $region43: #{tpu_custom_call.1} parent=39 // pred_region
          %s250 = sand.u32 %s92, 1
          %s251 = scalar_lea.sflag [#allocation5], %s250
          %s252 = sand.u32 %s92, 1
          %s253 = smul.addr %s252, 4
          %s254 = scalar_lea.vmem [#allocation6], %s253
          %255 = dma.done %s251, 64
        $region44: #{tpu_custom_call.1} parent=39 // pred_fallthru
          _
      $region40: #{tpu_custom_call.1} parent=5 // pred_fallthru
        _
    $region6: #{tpu_custom_call.1} parent=1 // loop_footer
      %s19 = sadd.s32 1, %s15
    $region7: #{tpu_custom_call.1} parent=1 // loop_footer_branch
      %14 = sbr.rel target = $region3
    $region8: #{tpu_custom_call.1} parent=1 // loop_exit
      _
    %256 = vsyncpa [#allocation4], 1
    %s257 = scalar_lea.sflag [#allocation4], 1
    %258 = vsyncpa %s257, 1
    %259 = vsyncpa [#allocation5], 1
    %s260 = scalar_lea.sflag [#allocation5], 1
    %261 = vsyncpa %s260, 1

</llo_original>
